<compile_context>
chip_gen: v6e
topology: v6e:2x2x1
jax: 0.10.0
libtpu: 0.0.40
codegen_flags: <defaults>
</compile_context>

<pallas_src>
import math

import jax
import jax.numpy as jnp
from jax.experimental import pallas as pl
from jax.experimental.pallas import tpu as pltpu


def _round_up(x, m):
    return ((x + m - 1) // m) * m


def _pick_tile(dim, max_tile, align):
    """Pick a tile size <= max_tile, multiple of `align`, minimizing padded work."""
    dim_r = _round_up(dim, align)
    if dim_r <= max_tile:
        return dim_r
    candidates = {max_tile}
    for num, den in ((3, 4), (1, 2), (3, 8), (1, 4)):
        c = _round_up(max(max_tile * num // den, align), align)
        candidates.add(min(c, max_tile))
    best, best_padded = max_tile, _round_up(dim_r, max_tile)
    for t in sorted(candidates, reverse=True):
        padded = _round_up(dim_r, t)
        if padded < best_padded:
            best, best_padded = t, padded
    return best


def _maybe_split_for_two_cores(tm, tn, B_pad, OUT_pad, sublane):
    """Ensure >=2 parallel (i, j) tiles when feasible so both v7x TCs get work."""
    if (B_pad // tm) * (OUT_pad // tn) >= 2:
        return tm, tn
    if tn >= 256 and (tn // 2) % 128 == 0:
        return tm, tn // 2
    if tm >= 2 * sublane and (tm // 2) % sublane == 0:
        return tm // 2, tn
    return tm, tn


def _linear_kernel_inplace(x_ref, w_ref, b_ref, o_ref):
    # f32 output: accumulate directly into the resident output block (no scratch).
    k = pl.program_id(2)

    @pl.when(k == 0)
    def _():
        o_ref[...] = jnp.broadcast_to(b_ref[...].astype(o_ref.dtype), o_ref.shape)

    o_ref[...] += jnp.dot(x_ref[...], w_ref[...], preferred_element_type=jnp.float32)


def _linear_kernel_acc(x_ref, w_ref, b_ref, o_ref, acc_ref):
    # Low-precision output: keep an f32 VMEM accumulator, cast once at the end.
    k = pl.program_id(2)

    @pl.when(k == 0)
    def _():
        acc_ref[...] = jnp.broadcast_to(b_ref[...].astype(jnp.float32), acc_ref.shape)

    acc_ref[...] += jnp.dot(x_ref[...], w_ref[...], preferred_element_type=jnp.float32)

    @pl.when(k == pl.num_programs(2) - 1)
    def _():
        o_ref[...] = acc_ref[...].astype(o_ref.dtype)


def linear_layer_forward(inputs, weight, bias, *, tm=512, tn=512, tk=1024,
                         compute_dtype=None):
    """Pallas equivalent of LinearLayer.forward; returns (output, output).

    inputs: [B, IN] ; weight: [OUT, IN] (PyTorch layout) ; bias: [OUT]
    """
    B, IN = inputs.shape
    OUT, IN_w = weight.shape
    assert IN == IN_w
    assert bias.shape == (OUT,)

    out_dtype = inputs.dtype
    op_dtype = compute_dtype if compute_dtype is not None else inputs.dtype
    itemsize = jnp.dtype(op_dtype).itemsize
    sublane = 8 * max(1, 4 // itemsize)  # 8 for f32, 16 for bf16, 32 for int8

    # Divisor-friendly, alignment-respecting tile sizes.
    tm = _pick_tile(B, tm, sublane)
    tn = _pick_tile(OUT, tn, 128)
    tk = _pick_tile(IN, tk, 128)

    B_pad = _round_up(B, tm)
    OUT_pad = _round_up(OUT, tn)
    IN_pad = _round_up(IN, tk)

    tm, tn = _maybe_split_for_two_cores(tm, tn, B_pad, OUT_pad, sublane)

    # Weight goes in as [IN, OUT] so the kernel is a plain (tm,tk)x(tk,tn) MXU dot.
    # TODO(synk): hoist this transpose/pad (and the bias pad) to layer construction.
    w_t = jnp.transpose(weight)

    x_p = inputs
    if (B_pad, IN_pad) != (B, IN):
        x_p = jnp.pad(inputs, ((0, B_pad - B), (0, IN_pad - IN)))
    w_p = w_t
    if (IN_pad, OUT_pad) != (IN, OUT):
        w_p = jnp.pad(w_t, ((0, IN_pad - IN), (0, OUT_pad - OUT)))
    b_p = bias
    if OUT_pad != OUT:
        b_p = jnp.pad(bias, (0, OUT_pad - OUT))
    b_p = b_p.reshape(1, OUT_pad)

    if compute_dtype is not None:
        x_p = x_p.astype(compute_dtype)
        w_p = w_p.astype(compute_dtype)

    grid = (B_pad // tm, OUT_pad // tn, IN_pad // tk)

    use_inplace = jnp.dtype(out_dtype) == jnp.dtype(jnp.float32)
    kernel = _linear_kernel_inplace if use_inplace else _linear_kernel_acc
    scratch = [] if use_inplace else [pltpu.VMEM((tm, tn), jnp.float32)]

    bytes_accessed = (
        B_pad * IN_pad * jnp.dtype(op_dtype).itemsize
        + IN_pad * OUT_pad * jnp.dtype(op_dtype).itemsize
        + OUT_pad * 4
        + B_pad * OUT_pad * jnp.dtype(out_dtype).itemsize
    )

    out_padded = pl.pallas_call(
        kernel,
        out_shape=jax.ShapeDtypeStruct((B_pad, OUT_pad), out_dtype),
        grid_spec=pltpu.PrefetchScalarGridSpec(
            num_scalar_prefetch=0,
            grid=grid,
            in_specs=[
                pl.BlockSpec((tm, tk), lambda i, j, k: (i, k)),   # x tile
                pl.BlockSpec((tk, tn), lambda i, j, k: (k, j)),   # weight tile [IN, OUT]
                pl.BlockSpec((1, tn), lambda i, j, k: (0, j)),    # bias tile
            ],
            out_specs=pl.BlockSpec((tm, tn), lambda i, j, k: (i, j)),
            scratch_shapes=scratch,
        ),
        compiler_params=pltpu.CompilerParams(
            dimension_semantics=("parallel", "parallel", "arbitrary"),
            vmem_limit_bytes=32 * 1024 * 1024,
        ),
        cost_estimate=pl.CostEstimate(
            flops=2 * B_pad * OUT_pad * IN_pad,
            transcendentals=0,
            bytes_accessed=int(bytes_accessed),
        ),
    )(x_p, w_p, b_p)

    out = out_padded
    if (B_pad, OUT_pad) != (B, OUT):
        out = out_padded[:B, :OUT]
    # forward returns the same tensor twice (label arg unused in the module)
    return out, out


if __name__ == "__main__":
    key = jax.random.PRNGKey(0)

    # --- Small test consistent with the module (batch=8, in=32, out=16) ---
    kx, kw, kb = jax.random.split(key, 3)
    batch, in_features, out_features = 8, 32, 16

    bound = 1.0 / math.sqrt(in_features)
    weight = jax.random.uniform(
        kw, (out_features, in_features), jnp.float32, minval=-bound, maxval=bound
    )
    bias = jax.random.uniform(
        kb, (out_features,), jnp.float32, minval=-bound, maxval=bound
    )
    x = jax.random.normal(kx, (batch, in_features), jnp.float32)

    out1, out2 = linear_layer_forward(x, weight, bias)
    jax.block_until_ready((out1, out2))

    ref = x @ weight.T + bias
    assert out1.shape == (batch, out_features)
    assert jnp.allclose(out1, ref, atol=1e-4, rtol=1e-4)
    assert jnp.allclose(out2, ref, atol=1e-4, rtol=1e-4)

    # --- Larger shape that exercises the multi-tile grid + K accumulation ---
    kx2, kw2, kb2 = jax.random.split(jax.random.PRNGKey(1), 3)
    B2, IN2, OUT2 = 384, 640, 384
    bound2 = 1.0 / math.sqrt(IN2)
    w2 = jax.random.uniform(kw2, (OUT2, IN2), jnp.float32, minval=-bound2, maxval=bound2)
    b2 = jax.random.uniform(kb2, (OUT2,), jnp.float32, minval=-bound2, maxval=bound2)
    x2 = jax.random.normal(kx2, (B2, IN2), jnp.float32)

    o2, _ = linear_layer_forward(x2, w2, b2)
    jax.block_until_ready(o2)
    ref2 = x2 @ w2.T + b2
    assert o2.shape == (B2, OUT2)
    assert jnp.allclose(o2, ref2, atol=1e-4, rtol=1e-4)

    print("KERNEL_OK")
</pallas_src>

<mosaic_0001>
module attributes {stable_mosaic.version = 11 : i64} {
  func.func @_linear_kernel_inplace(%arg0: i32, %arg1: i32, %arg2: i32, %arg3: memref<8x128xf32, #tpu.memory_space<vmem>>, %arg4: memref<128x128xf32, #tpu.memory_space<vmem>>, %arg5: memref<1x128xf32, #tpu.memory_space<vmem>>, %arg6: memref<8x128xf32, #tpu.memory_space<vmem>>) attributes {dimension_semantics = [#tpu.dimension_semantics<parallel>, #tpu.dimension_semantics<parallel>, #tpu.dimension_semantics<arbitrary>], iteration_bounds = array<i64: 1, 1, 1>, scalar_prefetch = 0 : i64, scratch_operands = 0 : i64, tpu.core_type = #tpu.core_type<tc>, window_params = [{transform_indices = @transform_0, window_bounds = array<i64: 8, 128>}, {transform_indices = @transform_1, window_bounds = array<i64: 128, 128>}, {transform_indices = @transform_2, window_bounds = array<i64: 1, 128>}, {transform_indices = @transform_3, window_bounds = array<i64: 8, 128>}]} {
    %c0_i32 = arith.constant 0 : i32
    %0 = arith.cmpi eq, %arg2, %c0_i32 : i32
    %1 = arith.extui %0 : i1 to i32
    %c0_i32_0 = arith.constant 0 : i32
    %2 = arith.cmpi ne, %1, %c0_i32_0 : i32
    scf.if %2 {
      %c0_8 = arith.constant 0 : index
      %c0_9 = arith.constant 0 : index
      %9 = vector.load %arg5[%c0_8, %c0_9] : memref<1x128xf32, #tpu.memory_space<vmem>>, vector<1x128xf32>
      %10 = vector.shape_cast %9 : vector<1x128xf32> to vector<1x128xf32>
      %11 = vector.broadcast %10 : vector<1x128xf32> to vector<8x128xf32>
      %c0_10 = arith.constant 0 : index
      %c0_11 = arith.constant 0 : index
      %12 = vector.load %arg6[%c0_10, %c0_11] : memref<8x128xf32, #tpu.memory_space<vmem>>, vector<8x128xf32>
      tpu.vector_store %arg6[%c0_10, %c0_11], %11 {strides = array<i32>} : memref<8x128xf32, #tpu.memory_space<vmem>>, vector<8x128xf32>,
    } else {
    }
    %c0 = arith.constant 0 : index
    %c0_1 = arith.constant 0 : index
    %3 = vector.load %arg6[%c0, %c0_1] : memref<8x128xf32, #tpu.memory_space<vmem>>, vector<8x128xf32>
    %c0_2 = arith.constant 0 : index
    %c0_3 = arith.constant 0 : index
    %4 = vector.load %arg3[%c0_2, %c0_3] : memref<8x128xf32, #tpu.memory_space<vmem>>, vector<8x128xf32>
    %c0_4 = arith.constant 0 : index
    %c0_5 = arith.constant 0 : index
    %5 = vector.load %arg4[%c0_4, %c0_5] : memref<128x128xf32, #tpu.memory_space<vmem>>, vector<128x128xf32>
    %cst = arith.constant dense<0.000000e+00> : vector<8x128xf32>
    %6 = tpu.matmul %4, %5, %cst {dimension_numbers = #tpu.dot_dimension_numbers<[1], [0], [0], [1], [0, 0, 1, 1], [], []>} : vector<8x128xf32>, vector<128x128xf32>, vector<8x128xf32> -> vector<8x128xf32>
    %7 = arith.addf %3, %6 : vector<8x128xf32>
    %c0_6 = arith.constant 0 : index
    %c0_7 = arith.constant 0 : index
    %8 = vector.load %arg6[%c0_6, %c0_7] : memref<8x128xf32, #tpu.memory_space<vmem>>, vector<8x128xf32>
    tpu.vector_store %arg6[%c0_6, %c0_7], %7 {strides = array<i32>} : memref<8x128xf32, #tpu.memory_space<vmem>>, vector<8x128xf32>,
    return
  }
  func.func @transform_0(%arg0: i32, %arg1: i32, %arg2: i32) -> (i32, i32) {
    %c0_i32 = arith.constant 0 : i32
    return %arg0, %arg2 : i32, i32
  }
  func.func @transform_1(%arg0: i32, %arg1: i32, %arg2: i32) -> (i32, i32) {
    %c0_i32 = arith.constant 0 : i32
    return %arg2, %arg1 : i32, i32
  }
  func.func @transform_2(%arg0: i32, %arg1: i32, %arg2: i32) -> (i32, i32) {
    %c0_i32 = arith.constant 0 : i32
    %c0_i32_0 = arith.constant 0 : i32
    return %c0_i32, %arg1 : i32, i32
  }
  func.func @transform_3(%arg0: i32, %arg1: i32, %arg2: i32) -> (i32, i32) {
    %c0_i32 = arith.constant 0 : i32
    return %arg0, %arg1 : i32, i32
  }
}

</mosaic_0001>

<llo_original>
// kernel: tpu_custom_call.1
$region0: #{tpu_custom_call.1}
  #allocation0 [shape = 'u32[]', space=smem, size = 0x4, offset = 0x4, fixed_abs, tag = 'smem constant byte address 0x4 - core index']
  #allocation1 [shape = 'u32[144,128]{1,0:T(1,128)}', space=vmem, size = 0x12000, scoped, tag = 'internal scratch']
  %s0 = inlined_call_operand.hbm [shape: f32[8,128], index: 0, kind: input, shape index: {}]
  %s1 = inlined_call_operand.hbm [shape: f32[128,128], index: 1, kind: input, shape index: {}]
  %s2 = inlined_call_operand.vmem [shape: f32[1,128], index: 2, kind: input, shape index: {}]
  %s3 = inlined_call_operand.hbm [shape: f32[8,128], index: 3, kind: output, shape index: {}]
  %s4 = sld [smem:[#allocation0]]
  $region34: #{tpu_custom_call.1} parent=0
    _
  %s6 = ssub.s32 1, %s4
  %s7 = scalar_select 0, %s6, %s4
  $region1: #{tpu_custom_call.1} parent=0
    #allocation2 [shape = 'u8[4096]{0}', space=vmem, size = 0x1000, scoped, tag = 'input window, operand 0, single buffered']
    #allocation3 [shape = 's32[1]{0}', space=sflag, size = 0x4, scoped, tag = 'scoped memory for tpu_custom_call.1']
    #allocation4 [shape = 's32[1]{0}', space=sflag, size = 0x4, scoped, tag = 'scoped memory for tpu_custom_call.1']
    #allocation5 [shape = 'u8[65536]{0}', space=vmem, size = 0x10000, scoped, tag = 'input window, operand 1, single buffered']
    #allocation6 [shape = 's32[1]{0}', space=sflag, size = 0x4, scoped, tag = 'scoped memory for tpu_custom_call.1']
    #allocation7 [shape = 'u8[4096]{0}', space=vmem, size = 0x1000, scoped, tag = 'output window, operand 0, single buffered']
    %8 = vsyncpa [#allocation3], 0
    %9 = vsyncpa [#allocation6], 0
    %10 = vsyncpa [#allocation4], 0
    // Predicated region
    $region2: #{tpu_custom_call.1} parent=1 // pred_check
      _
    $region3: #{tpu_custom_call.1} parent=1 // pred_check_branch
      %12 = sbr.rel (0) target = $region5
    $region4: #{tpu_custom_call.1} parent=1 // pred_region
      %s14 = ssub.s32 128, 128
      %15 = vsyncadd [#allocation3], %s14
      %s17 = sshll.u32 [#allocation2], 4
      %s18 = int_to_ptr.vmem [resolvable:$true] %s17
      %20 = dma.hbm_to_vmem [thread:$0]  %s0, 128, %s18, [#allocation3]
    $region5: #{tpu_custom_call.1} parent=1 // pred_fallthru
      _
    // Predicated region
    $region6: #{tpu_custom_call.1} parent=1 // pred_check
      _
    $region7: #{tpu_custom_call.1} parent=1 // pred_check_branch
      %22 = sbr.rel (0) target = $region9
    $region8: #{tpu_custom_call.1} parent=1 // pred_region
      %s24 = ssub.s32 2048, 2048
      %25 = vsyncadd [#allocation6], %s24
      %s26 = sshll.u32 [#allocation5], 4
      %s27 = int_to_ptr.vmem [resolvable:$true] %s26
      %32 = dma.hbm_to_vmem [thread:$0]  %s1, 2048, %s27, [#allocation6], 128, 128, 8
    $region9: #{tpu_custom_call.1} parent=1 // pred_fallthru
      _
    // Predicated region
    $region10: #{tpu_custom_call.1} parent=1 // pred_check
      _
    $region11: #{tpu_custom_call.1} parent=1 // pred_check_branch
      %34 = sbr.rel (0) target = $region13
    $region12: #{tpu_custom_call.1} parent=1 // pred_region
      _
    $region13: #{tpu_custom_call.1} parent=1 // pred_fallthru
      _
    // Predicated region
    $region14: #{tpu_custom_call.1} parent=1 // pred_check
      _
    $region15: #{tpu_custom_call.1} parent=1 // pred_check_branch
      %36 = sbr.rel (0) target = $region17
    $region16: #{tpu_custom_call.1} parent=1 // pred_region
      %37 = dma.done [#allocation3], 128
    $region17: #{tpu_custom_call.1} parent=1 // pred_fallthru
      _
    // Predicated region
    $region18: #{tpu_custom_call.1} parent=1 // pred_check
      _
    $region19: #{tpu_custom_call.1} parent=1 // pred_check_branch
      %39 = sbr.rel (0) target = $region21
    $region20: #{tpu_custom_call.1} parent=1 // pred_region
      %40 = dma.done [#allocation6], 2048
    $region21: #{tpu_custom_call.1} parent=1 // pred_fallthru
      _
    %p41 = scmp.eq.s32.totalorder 0, 0
    // Predicated region
    $region22: #{tpu_custom_call.1} parent=1 // pred_check
      %p42 = pneg %p41
    $region23: #{tpu_custom_call.1} parent=1 // pred_check_branch
      %44 = sbr.rel (%p42) target = $region25
    $region24: #{tpu_custom_call.1} parent=1 // pred_region
      %v45 = vld [vmem:[%s2] sm:$0x1]
      %v47 = vlaneseq
      %v48 = vshrl.u32 %v47, 7
      %v49 = vsub.s32 0, %v48
      %v50 = vrot.slane %v45, %v49
      %52 = vst [vmem:[#allocation7] sm:$0xff] %v50
    $region25: #{tpu_custom_call.1} parent=1 // pred_fallthru
      _
    %v53 = vld [vmem:[#allocation7] sm:$0xff]
    %v54 = vld [vmem:[#allocation2] sm:$0xff]
    %v55 = vld [vmem:[#allocation5] sm:$0xff]
    %v56 = vld [vmem:[#allocation5 + $0x8] sm:$0xff]
    %v57 = vld [vmem:[#allocation5 + $0x10] sm:$0xff]
    %v58 = vld [vmem:[#allocation5 + $0x18] sm:$0xff]
    %v59 = vld [vmem:[#allocation5 + $0x20] sm:$0xff]
    %v60 = vld [vmem:[#allocation5 + $0x28] sm:$0xff]
    %v61 = vld [vmem:[#allocation5 + $0x30] sm:$0xff]
    %v62 = vld [vmem:[#allocation5 + $0x38] sm:$0xff]
    %v63 = vld [vmem:[#allocation5 + $0x40] sm:$0xff]
    %v64 = vld [vmem:[#allocation5 + $0x48] sm:$0xff]
    %v65 = vld [vmem:[#allocation5 + $0x50] sm:$0xff]
    %v66 = vld [vmem:[#allocation5 + $0x58] sm:$0xff]
    %v67 = vld [vmem:[#allocation5 + $0x60] sm:$0xff]
    %v68 = vld [vmem:[#allocation5 + $0x68] sm:$0xff]
    %v69 = vld [vmem:[#allocation5 + $0x70] sm:$0xff]
    %v70 = vld [vmem:[#allocation5 + $0x78] sm:$0xff]
    %71 = vmatprep.subr.mxu0 0.0
    %72 = vmatpush1.msra.mxu0 %v70
    %73 = vmatprep.subr.mxu0 0.0
    %74 = vmatpush1.msra.mxu0 %v69
    %75 = vmatprep.subr.mxu0 0.0
    %76 = vmatpush1.msra.mxu0 %v68
    %77 = vmatprep.subr.mxu0 0.0
    %78 = vmatpush1.msra.mxu0 %v67
    %79 = vmatprep.subr.mxu0 0.0
    %80 = vmatpush1.msra.mxu0 %v66
    %81 = vmatprep.subr.mxu0 0.0
    %82 = vmatpush1.msra.mxu0 %v65
    %83 = vmatprep.subr.mxu0 0.0
    %84 = vmatpush1.msra.mxu0 %v64
    %85 = vmatprep.subr.mxu0 0.0
    %86 = vmatpush1.msra.mxu0 %v63
    %87 = vmatprep.subr.mxu0 0.0
    %88 = vmatpush1.msra.mxu0 %v62
    %89 = vmatprep.subr.mxu0 0.0
    %90 = vmatpush1.msra.mxu0 %v61
    %91 = vmatprep.subr.mxu0 0.0
    %92 = vmatpush1.msra.mxu0 %v60
    %93 = vmatprep.subr.mxu0 0.0
    %94 = vmatpush1.msra.mxu0 %v59
    %95 = vmatprep.subr.mxu0 0.0
    %96 = vmatpush1.msra.mxu0 %v58
    %97 = vmatprep.subr.mxu0 0.0
    %98 = vmatpush1.msra.mxu0 %v57
    %99 = vmatprep.subr.mxu0 0.0
    %100 = vmatpush1.msra.mxu0 %v56
    %101 = vmatprep.subr.mxu0 0.0
    %102 = vmatpush1.msra.mxu0 %v55
    %103 = vmatprep.subr.mxu0 0.0
    %104 = vmatpush2.msra.mxu0 0.0
    %105 = vmatprep.subr.mxu0 0.0
    %106 = vmatpush2.msra.mxu0 0.0
    %107 = vmatprep.subr.mxu0 0.0
    %108 = vmatpush2.msra.mxu0 0.0
    %109 = vmatprep.subr.mxu0 0.0
    %110 = vmatpush2.msra.mxu0 0.0
    %111 = vmatprep.subr.mxu0 0.0
    %112 = vmatpush2.msra.mxu0 0.0
    %113 = vmatprep.subr.mxu0 0.0
    %114 = vmatpush2.msra.mxu0 0.0
    %115 = vmatprep.subr.mxu0 0.0
    %116 = vmatpush2.msra.mxu0 0.0
    %117 = vmatprep.subr.mxu0 0.0
    %118 = vmatpush2.msra.mxu0 0.0
    %119 = vmatprep.subr.mxu0 0.0
    %120 = vmatpush2.msra.mxu0 0.0
    %121 = vmatprep.subr.mxu0 0.0
    %122 = vmatpush2.msra.mxu0 0.0
    %123 = vmatprep.subr.mxu0 0.0
    %124 = vmatpush2.msra.mxu0 0.0
    %125 = vmatprep.subr.mxu0 0.0
    %126 = vmatpush2.msra.mxu0 0.0
    %127 = vmatprep.subr.mxu0 0.0
    %128 = vmatpush2.msra.mxu0 0.0
    %129 = vmatprep.subr.mxu0 0.0
    %130 = vmatpush2.msra.mxu0 0.0
    %131 = vmatprep.subr.mxu0 0.0
    %132 = vmatpush2.msra.mxu0 0.0
    %133 = vmatprep.subr.mxu0 0.0
    %134 = vmatpush2.msra.mxu0 0.0
    %135 = vmatprep.mubr.f32.mxu0 0.0
    %136 = vmatmul.mubr.f32.gmra.mxu0 %v54
    %v137 = vpop.f32.mrf.mxu0
    %v138 = vadd.f32 0.0, %v137
    %v139 = vpop.f32.mrf.mxu0
    %140 = vdwg.mxu0
    %v141 = vadd.f32 %v53, %v138
    %142 = vst [vmem:[#allocation7] sm:$0xff] %v141
    // Predicated region
    $region26: #{tpu_custom_call.1} parent=1 // pred_check
      _
    $region27: #{tpu_custom_call.1} parent=1 // pred_check_branch
      %144 = sbr.rel (0) target = $region29
    $region28: #{tpu_custom_call.1} parent=1 // pred_region
      %s146 = ssub.s32 128, 128
      %147 = vsyncadd [#allocation4], %s146
      %s149 = sshll.u32 [#allocation7], 4
      %s150 = int_to_ptr.vmem [resolvable:$true] %s149
      %152 = dma.vmem_to_hbm [thread:$0]  %s150, 128, %s3, [#allocation4]
    $region29: #{tpu_custom_call.1} parent=1 // pred_fallthru
      _
    // Predicated region
    $region30: #{tpu_custom_call.1} parent=1 // pred_check
      _
    $region31: #{tpu_custom_call.1} parent=1 // pred_check_branch
      %154 = sbr.rel (0) target = $region33
    $region32: #{tpu_custom_call.1} parent=1 // pred_region
      %155 = dma.done [#allocation4], 128
    $region33: #{tpu_custom_call.1} parent=1 // pred_fallthru
      _
    %156 = vsyncpa [#allocation3], 1
    %157 = vsyncpa [#allocation6], 1
    %158 = vsyncpa [#allocation4], 1

</llo_original>
